<compile_context>
chip_gen: v7x
topology: tpu7x:2x2x1
jax: 0.10.0
libtpu: 0.0.40
codegen_flags: <defaults>
</compile_context>

<pallas_src>
import math

import jax
import jax.numpy as jnp
from jax.experimental import pallas as pl
from jax.experimental.pallas import tpu as pltpu


_HIDDEN = 128                      # hidden width of both actor & critic MLPs
_LOG2PI = math.log(2.0 * math.pi)


def _sac_forward_kernel(xn_ref, w1_ref, b1_ref, w2a_ref, b2a_ref,
                        w1ca_ref, w2c_ref, b2c_ref,
                        act_ref, lp_ref, q_ref):
    xn = xn_ref[...]                                   # (TB, S+A) = [states | noise]
    hidden = b1_ref.shape[1] // 2                      # 128
    a_dim = act_ref.shape[1]
    s_dim = xn.shape[1] - a_dim

    # ---- fused first layer: one MXU pass -> [actor hidden pre | critic state pre]
    # (rows of w1 under the noise lanes are zero, so noise contributes nothing)
    h12 = jnp.dot(xn, w1_ref[...], preferred_element_type=jnp.float32) + b1_ref[...]
    h_a = jnp.maximum(h12[:, :hidden], 0.0)            # (TB, 128) actor hidden
    hc_pre = h12[:, hidden:]                           # (TB, 128) critic state part + b1c

    # ---- actor head: single matmul, lane-split into mean / log_std ----
    head = jnp.dot(h_a, w2a_ref[...], preferred_element_type=jnp.float32) + b2a_ref[...]
    mean = head[:, :a_dim]
    log_std = jnp.clip(head[:, a_dim:], -20.0, 2.0)
    std = jnp.exp(log_std)                             # EUP

    # ---- reparameterized sample + Normal log-prob (diff = std*noise exactly) ----
    noise = xn[:, s_dim:]                              # (TB, A)
    action = mean + std * noise
    lp = -0.5 * (noise * noise) - log_std - 0.5 * _LOG2PI
    log_prob = jnp.sum(lp, axis=-1, keepdims=True)     # (TB, 1)

    # ---- critic on concat([states, action]): state part already in hc_pre ----
    h_c = jnp.maximum(
        hc_pre + jnp.dot(action, w1ca_ref[...], preferred_element_type=jnp.float32),
        0.0)                                           # (TB, 128)
    q = jnp.dot(h_c, w2c_ref[...], preferred_element_type=jnp.float32) + b2c_ref[...]

    act_ref[...] = action.astype(act_ref.dtype)
    lp_ref[...] = log_prob.astype(lp_ref.dtype)
    q_ref[...] = q.astype(q_ref.dtype)


def _round_up(x, m):
    return ((x + m - 1) // m) * m


def _choose_tile(batch, tile_b):
    """Sublane-aligned batch tile; capped so the grid keeps >=2 steps when the
    batch allows (v7x: lets "parallel" shard steps across both TensorCores)."""
    b8 = _round_up(batch, 8)
    tb = min(_round_up(tile_b, 8), b8)
    half = _round_up((b8 + 1) // 2, 8)
    if b8 >= 16 and tb > half:
        tb = half
    return tb


def sac_forward(states, noise, params, *, tile_b=1024):
    """Fused SAC forward.  Returns ((action (B,A), log_prob (B,)), q (B,1))."""
    w1a, b1a, w2a, b2a, w1c, b1c, w2c, b2c = params
    B, S = states.shape
    H = w1a.shape[1]
    A2 = w2a.shape[1]
    A = A2 // 2
    assert w1c.shape[0] == S + A

    # ---- host-side weight fusion (tiny, one-time under jit) ----
    w1c_s, w1c_a = w1c[:S, :], w1c[S:, :]
    # (S+A, 2H): [x | noise] @ w1_big = [actor hidden pre | critic-state pre]
    w1_big = jnp.concatenate(
        [jnp.concatenate([w1a, w1c_s], axis=1),
         jnp.zeros((A, 2 * H), w1a.dtype)], axis=0)
    b1_big = jnp.concatenate([b1a, b1c], axis=1)            # (1, 2H)

    # One streamed input: [states | noise]  (single BlockSpec / DMA per step).
    xn = jnp.concatenate([states, noise], axis=1)           # (B, S+A)

    TB = _choose_tile(B, tile_b)
    B_pad = _round_up(B, TB)
    if B_pad != B:
        xn = jnp.pad(xn, ((0, B_pad - B), (0, 0)))
    grid = (B_pad // TB,)

    # VMEM headroom check (double-buffered streamed tiles + resident weights);
    # comfortably below the 32 MiB default scoped limit on every generation.
    vmem_bytes = 4 * (2 * TB * (S + A)                       # xn double buffer
                      + 2 * TB * (A + 2)                     # 3 outputs, buffered
                      + (S + A) * 2 * H + 2 * H              # w1_big + b1_big
                      + H * A2 + A2 + A * H + H + 1)         # w2a,b2a,w1c_a,w2c,b2c
    assert vmem_bytes < 32 * 1024 * 1024, vmem_bytes

    flops = 2 * B_pad * ((S + A) * 2 * H + H * A2 + A * H + H)
    bytes_accessed = 4 * (B_pad * (S + A) + B_pad * (A + 2)
                          + w1_big.size + b1_big.size + w2a.size + b2a.size
                          + w1c_a.size + w2c.size + b2c.size)

    action, log_prob, q = pl.pallas_call(
        _sac_forward_kernel,
        out_shape=(
            jax.ShapeDtypeStruct((B_pad, A), jnp.float32),
            jax.ShapeDtypeStruct((B_pad, 1), jnp.float32),
            jax.ShapeDtypeStruct((B_pad, 1), jnp.float32),
        ),
        grid_spec=pl.GridSpec(
            grid=grid,
            in_specs=[
                pl.BlockSpec((TB, S + A), lambda i: (i, 0)),     # [states|noise] (tiled)
                pl.BlockSpec((S + A, 2 * H), lambda i: (0, 0)),  # w1_big   (resident)
                pl.BlockSpec((1, 2 * H), lambda i: (0, 0)),      # b1_big
                pl.BlockSpec((H, A2), lambda i: (0, 0)),         # w2a (mean|log_std)
                pl.BlockSpec((1, A2), lambda i: (0, 0)),         # b2a
                pl.BlockSpec((A, H), lambda i: (0, 0)),          # w1c action rows
                pl.BlockSpec((H, 1), lambda i: (0, 0)),          # w2c
                pl.BlockSpec((1, 1), lambda i: (0, 0)),          # b2c
            ],
            out_specs=(
                pl.BlockSpec((TB, A), lambda i: (i, 0)),         # action
                pl.BlockSpec((TB, 1), lambda i: (i, 0)),         # log_prob
                pl.BlockSpec((TB, 1), lambda i: (i, 0)),         # q
            ),
        ),
        compiler_params=pltpu.CompilerParams(
            dimension_semantics=("parallel",)),
        cost_estimate=pl.CostEstimate(
            flops=flops,
            transcendentals=B_pad * A,
            bytes_accessed=bytes_accessed),
    )(xn, w1_big, b1_big, w2a, b2a, w1c_a, w2c, b2c)

    return (action[:B], log_prob[:B, 0]), q[:B]


def init_params(key, state_dim, action_dim, hidden=_HIDDEN, dtype=jnp.float32):
    """torch.nn.Linear-style init (uniform(-1/sqrt(fan_in), 1/sqrt(fan_in))),
    weights stored transposed: (in_features, out_features)."""
    ks = jax.random.split(key, 8)
    b_a1 = 1.0 / math.sqrt(state_dim)
    b_a2 = 1.0 / math.sqrt(hidden)
    b_c1 = 1.0 / math.sqrt(state_dim + action_dim)
    b_c2 = 1.0 / math.sqrt(hidden)
    w1a = jax.random.uniform(ks[0], (state_dim, hidden), dtype, -b_a1, b_a1)
    b1a = jax.random.uniform(ks[1], (1, hidden), dtype, -b_a1, b_a1)
    w2a = jax.random.uniform(ks[2], (hidden, 2 * action_dim), dtype, -b_a2, b_a2)
    b2a = jax.random.uniform(ks[3], (1, 2 * action_dim), dtype, -b_a2, b_a2)
    w1c = jax.random.uniform(ks[4], (state_dim + action_dim, hidden), dtype, -b_c1, b_c1)
    b1c = jax.random.uniform(ks[5], (1, hidden), dtype, -b_c1, b_c1)
    w2c = jax.random.uniform(ks[6], (hidden, 1), dtype, -b_c2, b_c2)
    b2c = jax.random.uniform(ks[7], (1, 1), dtype, -b_c2, b_c2)
    return w1a, b1a, w2a, b2a, w1c, b1c, w2c, b2c


def ref_forward(states, noise, params):
    """Pure-JAX reference with the original (un-fused) math."""
    w1a, b1a, w2a, b2a, w1c, b1c, w2c, b2c = params
    A = w2a.shape[1] // 2
    h = jnp.maximum(states @ w1a + b1a, 0.0)
    head = h @ w2a + b2a
    mean, log_std = head[:, :A], head[:, A:]
    log_std = jnp.clip(log_std, -20.0, 2.0)
    std = jnp.exp(log_std)
    action = mean + std * noise
    lp = -0.5 * ((action - mean) ** 2) / (std * std) - log_std - 0.5 * _LOG2PI
    log_prob = jnp.sum(lp, axis=-1)
    xc = jnp.concatenate([states, action], axis=-1)
    hc = jnp.maximum(xc @ w1c + b1c, 0.0)
    q = hc @ w2c + b2c
    return (action, log_prob), q


if __name__ == "__main__":
    key = jax.random.PRNGKey(0)
    k_params, k_states, k_noise = jax.random.split(key, 3)

    batch = 48           # not a power of two -> exercises tile cap (grid=(2,)) + padding path
    state_dim = 16
    action_dim = 4

    params = init_params(k_params, state_dim, action_dim)
    states = jax.random.normal(k_states, (batch, state_dim), jnp.float32)
    noise = jax.random.normal(k_noise, (batch, action_dim), jnp.float32)

    (action, log_prob), q = sac_forward(states, noise, params)
    action = jax.block_until_ready(action)
    log_prob = jax.block_until_ready(log_prob)
    q = jax.block_until_ready(q)

    (a_ref, lp_ref), q_ref = ref_forward(states, noise, params)

    assert action.shape == (batch, action_dim)
    assert log_prob.shape == (batch,)
    assert q.shape == (batch, 1)
    assert jnp.allclose(action, a_ref, atol=1e-3, rtol=1e-3)
    assert jnp.allclose(log_prob, lp_ref, atol=1e-3, rtol=1e-3)
    assert jnp.allclose(q, q_ref, atol=1e-3, rtol=1e-3)

    print("KERNEL_OK")
</pallas_src>

<mosaic_0001>
module attributes {stable_mosaic.version = 11 : i64} {
  func.func @_sac_forward_kernel(%arg0: i32, %arg1: memref<24x20xf32, #tpu.memory_space<vmem>>, %arg2: memref<20x256xf32, #tpu.memory_space<vmem>>, %arg3: memref<1x256xf32, #tpu.memory_space<vmem>>, %arg4: memref<128x8xf32, #tpu.memory_space<vmem>>, %arg5: memref<1x8xf32, #tpu.memory_space<vmem>>, %arg6: memref<4x128xf32, #tpu.memory_space<vmem>>, %arg7: memref<128x1xf32, #tpu.memory_space<vmem>>, %arg8: memref<1x1xf32, #tpu.memory_space<vmem>>, %arg9: memref<24x4xf32, #tpu.memory_space<vmem>>, %arg10: memref<24x1xf32, #tpu.memory_space<vmem>>, %arg11: memref<24x1xf32, #tpu.memory_space<vmem>>) attributes {dimension_semantics = [#tpu.dimension_semantics<parallel>], iteration_bounds = array<i64: 2>, scalar_prefetch = 0 : i64, scratch_operands = 0 : i64, tpu.core_type = #tpu.core_type<tc>, window_params = [{transform_indices = @transform_0, window_bounds = array<i64: 24, 20>}, {pipeline_mode = #tpu.pipeline_mode<synchronous>, transform_indices = @transform_1, window_bounds = array<i64: 20, 256>}, {pipeline_mode = #tpu.pipeline_mode<synchronous>, transform_indices = @transform_2, window_bounds = array<i64: 1, 256>}, {pipeline_mode = #tpu.pipeline_mode<synchronous>, transform_indices = @transform_3, window_bounds = array<i64: 128, 8>}, {pipeline_mode = #tpu.pipeline_mode<synchronous>, transform_indices = @transform_4, window_bounds = array<i64: 1, 8>}, {pipeline_mode = #tpu.pipeline_mode<synchronous>, transform_indices = @transform_5, window_bounds = array<i64: 4, 128>}, {pipeline_mode = #tpu.pipeline_mode<synchronous>, transform_indices = @transform_6, window_bounds = array<i64: 128, 1>}, {pipeline_mode = #tpu.pipeline_mode<synchronous>, transform_indices = @transform_7, window_bounds = array<i64: 1, 1>}, {transform_indices = @transform_8, window_bounds = array<i64: 24, 4>}, {transform_indices = @transform_9, window_bounds = array<i64: 24, 1>}, {transform_indices = @transform_10, window_bounds = array<i64: 24, 1>}]} {
    %c0 = arith.constant 0 : index
    %c0_0 = arith.constant 0 : index
    %0 = vector.load %arg1[%c0, %c0_0] : memref<24x20xf32, #tpu.memory_space<vmem>>, vector<24x20xf32>
    %c0_1 = arith.constant 0 : index
    %c0_2 = arith.constant 0 : index
    %1 = vector.load %arg2[%c0_1, %c0_2] : memref<20x256xf32, #tpu.memory_space<vmem>>, vector<20x256xf32>
    %cst = arith.constant dense<0.000000e+00> : vector<24x256xf32>
    %2 = tpu.matmul %0, %1, %cst {dimension_numbers = #tpu.dot_dimension_numbers<[1], [0], [0], [1], [0, 0, 1, 1], [], []>} : vector<24x20xf32>, vector<20x256xf32>, vector<24x256xf32> -> vector<24x256xf32>
    %c0_3 = arith.constant 0 : index
    %c0_4 = arith.constant 0 : index
    %3 = vector.load %arg3[%c0_3, %c0_4] : memref<1x256xf32, #tpu.memory_space<vmem>>, vector<1x256xf32>
    %4 = vector.broadcast %3 : vector<1x256xf32> to vector<24x256xf32>
    %5 = arith.addf %2, %4 : vector<24x256xf32>
    %6 = vector.extract_strided_slice %5 {offsets = [0, 0], sizes = [24, 128], strides = [1, 1]} : vector<24x256xf32> to vector<24x128xf32>
    %cst_5 = arith.constant 0.000000e+00 : f32
    %7 = vector.broadcast %cst_5 : f32 to vector<24x128xf32>
    %8 = arith.maximumf %6, %7 : vector<24x128xf32>
    %9 = vector.extract_strided_slice %5 {offsets = [0, 128], sizes = [24, 128], strides = [1, 1]} : vector<24x256xf32> to vector<24x128xf32>
    %c0_6 = arith.constant 0 : index
    %c0_7 = arith.constant 0 : index
    %10 = vector.load %arg4[%c0_6, %c0_7] : memref<128x8xf32, #tpu.memory_space<vmem>>, vector<128x8xf32>
    %cst_8 = arith.constant dense<0.000000e+00> : vector<24x8xf32>
    %11 = tpu.matmul %8, %10, %cst_8 {dimension_numbers = #tpu.dot_dimension_numbers<[1], [0], [0], [1], [0, 0, 1, 1], [], []>} : vector<24x128xf32>, vector<128x8xf32>, vector<24x8xf32> -> vector<24x8xf32>
    %c0_9 = arith.constant 0 : index
    %c0_10 = arith.constant 0 : index
    %12 = vector.load %arg5[%c0_9, %c0_10] : memref<1x8xf32, #tpu.memory_space<vmem>>, vector<1x8xf32>
    %13 = vector.broadcast %12 : vector<1x8xf32> to vector<24x8xf32>
    %14 = arith.addf %11, %13 : vector<24x8xf32>
    %15 = vector.extract_strided_slice %14 {offsets = [0, 0], sizes = [24, 4], strides = [1, 1]} : vector<24x8xf32> to vector<24x4xf32>
    %16 = vector.extract_strided_slice %14 {offsets = [0, 4], sizes = [24, 4], strides = [1, 1]} : vector<24x8xf32> to vector<24x4xf32>
    %cst_11 = arith.constant -2.000000e+01 : f32
    %cst_12 = arith.constant 2.000000e+00 : f32
    %17 = vector.broadcast %cst_11 : f32 to vector<24x4xf32>
    %18 = arith.maximumf %17, %16 : vector<24x4xf32>
    %19 = vector.broadcast %cst_12 : f32 to vector<24x4xf32>
    %20 = arith.minimumf %19, %18 : vector<24x4xf32>
    %21 = math.exp %20 : vector<24x4xf32>
    %22 = vector.extract_strided_slice %0 {offsets = [0, 16], sizes = [24, 4], strides = [1, 1]} : vector<24x20xf32> to vector<24x4xf32>
    %23 = arith.mulf %21, %22 : vector<24x4xf32>
    %24 = arith.addf %15, %23 : vector<24x4xf32>
    %25 = arith.mulf %22, %22 : vector<24x4xf32>
    %cst_13 = arith.constant -5.000000e-01 : f32
    %26 = vector.broadcast %cst_13 : f32 to vector<24x4xf32>
    %27 = arith.mulf %26, %25 : vector<24x4xf32>
    %28 = arith.subf %27, %20 : vector<24x4xf32>
    %cst_14 = arith.constant 0.918938517 : f32
    %29 = vector.broadcast %cst_14 : f32 to vector<24x4xf32>
    %30 = arith.subf %28, %29 : vector<24x4xf32>
    %cst_15 = arith.constant dense<0.000000e+00> : vector<24xf32>
    %31 = vector.multi_reduction <add>, %30, %cst_15 [1] : vector<24x4xf32> to vector<24xf32>
    %32 = vector.shape_cast %31 : vector<24xf32> to vector<24x1xf32>
    %c0_16 = arith.constant 0 : index
    %c0_17 = arith.constant 0 : index
    %33 = vector.load %arg6[%c0_16, %c0_17] : memref<4x128xf32, #tpu.memory_space<vmem>>, vector<4x128xf32>
    %cst_18 = arith.constant dense<0.000000e+00> : vector<24x128xf32>
    %34 = tpu.matmul %24, %33, %cst_18 {dimension_numbers = #tpu.dot_dimension_numbers<[1], [0], [0], [1], [0, 0, 1, 1], [], []>} : vector<24x4xf32>, vector<4x128xf32>, vector<24x128xf32> -> vector<24x128xf32>
    %35 = arith.addf %9, %34 : vector<24x128xf32>
    %cst_19 = arith.constant 0.000000e+00 : f32
    %36 = vector.broadcast %cst_19 : f32 to vector<24x128xf32>
    %37 = arith.maximumf %35, %36 : vector<24x128xf32>
    %c0_20 = arith.constant 0 : index
    %c0_21 = arith.constant 0 : index
    %38 = vector.load %arg7[%c0_20, %c0_21] : memref<128x1xf32, #tpu.memory_space<vmem>>, vector<128x1xf32>
    %cst_22 = arith.constant dense<0.000000e+00> : vector<24x1xf32>
    %39 = tpu.matmul %37, %38, %cst_22 {dimension_numbers = #tpu.dot_dimension_numbers<[1], [0], [0], [1], [0, 0, 1, 1], [], []>} : vector<24x128xf32>, vector<128x1xf32>, vector<24x1xf32> -> vector<24x1xf32>
    %c0_23 = arith.constant 0 : index
    %c0_24 = arith.constant 0 : index
    %40 = vector.load %arg8[%c0_23, %c0_24] : memref<1x1xf32, #tpu.memory_space<vmem>>, vector<1x1xf32>
    %41 = vector.broadcast %40 : vector<1x1xf32> to vector<24x1xf32>
    %42 = arith.addf %39, %41 : vector<24x1xf32>
    %c0_25 = arith.constant 0 : index
    %c0_26 = arith.constant 0 : index
    %43 = vector.load %arg9[%c0_25, %c0_26] : memref<24x4xf32, #tpu.memory_space<vmem>>, vector<24x4xf32>
    tpu.vector_store %arg9[%c0_25, %c0_26], %24 {strides = array<i32>} : memref<24x4xf32, #tpu.memory_space<vmem>>, vector<24x4xf32>,
    %c0_27 = arith.constant 0 : index
    %c0_28 = arith.constant 0 : index
    %44 = vector.load %arg10[%c0_27, %c0_28] : memref<24x1xf32, #tpu.memory_space<vmem>>, vector<24x1xf32>
    tpu.vector_store %arg10[%c0_27, %c0_28], %32 {strides = array<i32>} : memref<24x1xf32, #tpu.memory_space<vmem>>, vector<24x1xf32>,
    %c0_29 = arith.constant 0 : index
    %c0_30 = arith.constant 0 : index
    %45 = vector.load %arg11[%c0_29, %c0_30] : memref<24x1xf32, #tpu.memory_space<vmem>>, vector<24x1xf32>
    tpu.vector_store %arg11[%c0_29, %c0_30], %42 {strides = array<i32>} : memref<24x1xf32, #tpu.memory_space<vmem>>, vector<24x1xf32>,
    return
  }
  func.func @transform_0(%arg0: i32) -> (i32, i32) {
    %c0_i32 = arith.constant 0 : i32
    %c0_i32_0 = arith.constant 0 : i32
    return %arg0, %c0_i32 : i32, i32
  }
  func.func @transform_1(%arg0: i32) -> (i32, i32) {
    %c0_i32 = arith.constant 0 : i32
    %c0_i32_0 = arith.constant 0 : i32
    %c0_i32_1 = arith.constant 0 : i32
    return %c0_i32, %c0_i32_0 : i32, i32
  }
  func.func @transform_2(%arg0: i32) -> (i32, i32) {
    %c0_i32 = arith.constant 0 : i32
    %c0_i32_0 = arith.constant 0 : i32
    %c0_i32_1 = arith.constant 0 : i32
    return %c0_i32, %c0_i32_0 : i32, i32
  }
  func.func @transform_3(%arg0: i32) -> (i32, i32) {
    %c0_i32 = arith.constant 0 : i32
    %c0_i32_0 = arith.constant 0 : i32
    %c0_i32_1 = arith.constant 0 : i32
    return %c0_i32, %c0_i32_0 : i32, i32
  }
  func.func @transform_4(%arg0: i32) -> (i32, i32) {
    %c0_i32 = arith.constant 0 : i32
    %c0_i32_0 = arith.constant 0 : i32
    %c0_i32_1 = arith.constant 0 : i32
    return %c0_i32, %c0_i32_0 : i32, i32
  }
  func.func @transform_5(%arg0: i32) -> (i32, i32) {
    %c0_i32 = arith.constant 0 : i32
    %c0_i32_0 = arith.constant 0 : i32
    %c0_i32_1 = arith.constant 0 : i32
    return %c0_i32, %c0_i32_0 : i32, i32
  }
  func.func @transform_6(%arg0: i32) -> (i32, i32) {
    %c0_i32 = arith.constant 0 : i32
    %c0_i32_0 = arith.constant 0 : i32
    %c0_i32_1 = arith.constant 0 : i32
    return %c0_i32, %c0_i32_0 : i32, i32
  }
  func.func @transform_7(%arg0: i32) -> (i32, i32) {
    %c0_i32 = arith.constant 0 : i32
    %c0_i32_0 = arith.constant 0 : i32
    %c0_i32_1 = arith.constant 0 : i32
    return %c0_i32, %c0_i32_0 : i32, i32
  }
  func.func @transform_8(%arg0: i32) -> (i32, i32) {
    %c0_i32 = arith.constant 0 : i32
    %c0_i32_0 = arith.constant 0 : i32
    return %arg0, %c0_i32 : i32, i32
  }
  func.func @transform_9(%arg0: i32) -> (i32, i32) {
    %c0_i32 = arith.constant 0 : i32
    %c0_i32_0 = arith.constant 0 : i32
    return %arg0, %c0_i32 : i32, i32
  }
  func.func @transform_10(%arg0: i32) -> (i32, i32) {
    %c0_i32 = arith.constant 0 : i32
    %c0_i32_0 = arith.constant 0 : i32
    return %arg0, %c0_i32 : i32, i32
  }
}

</mosaic_0001>

<llo_original>
// kernel: tpu_custom_call.1
$region0: #{tpu_custom_call.1}
  #allocation0 [shape = 'u32[]', space=smem, size = 0x4, offset = 0x4, fixed_abs, tag = 'smem constant byte address 0x4 - core index']
  #allocation1 [shape = 'u32[144,128]{1,0:T(1,128)}', space=vmem, size = 0x12000, scoped, tag = 'internal scratch']
  #allocation2 [shape = 'f32[1,1]{1,0:T(1,128)S(1)}', space=vmem, size = 0x200, scoped, tag = 'scoped memory for tpu_custom_call.1']
  %s0 = inlined_call_operand.vmem [shape: f32[48,20], index: 0, kind: input, shape index: {}]
  %s1 = inlined_call_operand.vmem [shape: f32[20,256], index: 1, kind: input, shape index: {}]
  %s2 = inlined_call_operand.vmem [shape: f32[1,256], index: 2, kind: input, shape index: {}]
  %s3 = inlined_call_operand.vmem [shape: f32[128,8], index: 3, kind: input, shape index: {}]
  %s4 = inlined_call_operand.vmem [shape: f32[1,8], index: 4, kind: input, shape index: {}]
  %s5 = inlined_call_operand.vmem [shape: f32[4,128], index: 5, kind: input, shape index: {}]
  %s6 = inlined_call_operand.vmem [shape: f32[128,1], index: 6, kind: input, shape index: {}]
  %s7 = inlined_call_operand.<no memory space> [shape: f32[1,1], index: 7, kind: input, shape index: {}]
  %s8 = inlined_call_operand.vmem [shape: f32[48,4], index: 8, kind: output, shape index: {0}]
  %s9 = inlined_call_operand.vmem [shape: f32[48,1], index: 9, kind: output, shape index: {1}]
  %s10 = inlined_call_operand.vmem [shape: f32[48,1], index: 10, kind: output, shape index: {2}]
  %11 = xla_tuple %s8, %s9, %s10
  %s12 = sld [smem:[#allocation0]]
  $region81: #{tpu_custom_call.1} parent=0
    _
  %s14 = ssub.s32 1, %s12
  %s15 = scalar_select 0, %s14, %s12
  %v16 = vstv %s7
  %17 = vst [vmem:[#allocation2] sm:$0x1] %v16
  loop: start=0, step=1, limit=4
  $region2: #{tpu_custom_call.1} parent=0 // loop_pre_header
    _
  $region3: #{tpu_custom_call.1} parent=0 // loop_header
    %s19 = sphi 0, %s23
    %p20 = scmp.ge.s32.totalorder %s19, 4
    %s29 = sphi 0, %s31
    %s32 = sphi 0, %s29
    %s33 = sphi 0, %s32
    %s49 = sphi 0, %s33
    %s53 = sphi 0, %s53
    %s55 = sphi 0, %s53
    %s56 = sphi 0, %s55
    %s70 = sphi 0, %s56
    %s74 = sphi 0, %s74
    %s76 = sphi 0, %s74
    %s77 = sphi 0, %s76
    %s91 = sphi 0, %s77
    %s95 = sphi 0, %s95
    %s97 = sphi 0, %s95
    %s98 = sphi 0, %s97
    %s112 = sphi 0, %s98
    %s116 = sphi 0, %s116
    %s118 = sphi 0, %s116
    %s119 = sphi 0, %s118
    %s133 = sphi 0, %s119
    %s137 = sphi 0, %s137
    %s139 = sphi 0, %s137
    %s140 = sphi 0, %s139
    %s154 = sphi 0, %s140
    %s158 = sphi 0, %s158
    %s160 = sphi 0, %s158
    %s161 = sphi 0, %s160
    %s175 = sphi 0, %s161
    %s179 = sphi 0, %s179
    %s181 = sphi 0, %s179
    %s182 = sphi 0, %s181
    %s196 = sphi 0, %s182
    %s202 = sphi 0, %s204
    %s205 = sphi 0, %s202
    %s206 = sphi 0, %s205
    %s222 = sphi 0, %s206
    %s228 = sphi 0, %s230
    %s231 = sphi 0, %s228
    %s232 = sphi 0, %s231
    %s248 = sphi 0, %s232
    %s254 = sphi 0, %s256
    %s257 = sphi 0, %s254
    %s258 = sphi 0, %s257
    %s274 = sphi 0, %s258
  $region4: #{tpu_custom_call.1} parent=0 // loop_header_branch
    %22 = sbr.rel (%p20) target = $region8
  $region5: #{tpu_custom_call.1} parent=0 // loop_body
    %s24 = ssub.s32 %s19, 1
    %s25 = ssub.s32 %s19, 2
    %s26 = sadd.s32 %s19, 1
    %s27 = ssub.s32 %s19, %s26
    %p28 = scmp.eq.s32.totalorder %s27, 0
    %s30 = sadd.s32 %s29, 1
    %s31 = scalar_select %p28, %s29, %s30
    %p34 = pneg %p28
    %p35 = scmp.eq.s32.totalorder %s19, 1
    %p36 = por %p34, %p35
    %p37 = scmp.ne.s32.totalorder %s29, %s32
    %p38 = scmp.eq.s32.totalorder %s19, 0
    %p39 = por %p37, %p38
    %p40 = scmp.ne.s32.totalorder %s29, %s32
    %p41 = scmp.eq.s32.totalorder %s24, 1
    %p42 = por %p40, %p41
    %p43 = scmp.ne.s32.totalorder %s32, %s33
    %p44 = scmp.eq.s32.totalorder %s24, 0
    %p45 = por %p43, %p44
    %p46 = scmp.ne.s32.totalorder %s32, %s33
    %p47 = scmp.eq.s32.totalorder %s25, 1
    %p48 = por %p46, %p47
    %p50 = scmp.ne.s32.totalorder %s33, %s49
    %p51 = scmp.eq.s32.totalorder %s25, 0
    %p52 = por %p50, %p51
    %s54 = sadd.s32 %s53, 1
    %p57 = scmp.eq.s32.totalorder %s19, 1
    %p58 = scmp.ne.s32.totalorder %s53, %s55
    %p59 = scmp.eq.s32.totalorder %s19, 0
    %p60 = por %p58, %p59
    %p61 = scmp.ne.s32.totalorder %s53, %s55
    %p62 = scmp.eq.s32.totalorder %s24, 1
    %p63 = por %p61, %p62
    %p64 = scmp.ne.s32.totalorder %s55, %s56
    %p65 = scmp.eq.s32.totalorder %s24, 0
    %p66 = por %p64, %p65
    %p67 = scmp.ne.s32.totalorder %s55, %s56
    %p68 = scmp.eq.s32.totalorder %s25, 1
    %p69 = por %p67, %p68
    %p71 = scmp.ne.s32.totalorder %s56, %s70
    %p72 = scmp.eq.s32.totalorder %s25, 0
    %p73 = por %p71, %p72
    %s75 = sadd.s32 %s74, 1
    %p78 = scmp.eq.s32.totalorder %s19, 1
    %p79 = scmp.ne.s32.totalorder %s74, %s76
    %p80 = scmp.eq.s32.totalorder %s19, 0
    %p81 = por %p79, %p80
    %p82 = scmp.ne.s32.totalorder %s74, %s76
    %p83 = scmp.eq.s32.totalorder %s24, 1
    %p84 = por %p82, %p83
    %p85 = scmp.ne.s32.totalorder %s76, %s77
    %p86 = scmp.eq.s32.totalorder %s24, 0
    %p87 = por %p85, %p86
    %p88 = scmp.ne.s32.totalorder %s76, %s77
    %p89 = scmp.eq.s32.totalorder %s25, 1
    %p90 = por %p88, %p89
    %p92 = scmp.ne.s32.totalorder %s77, %s91
    %p93 = scmp.eq.s32.totalorder %s25, 0
    %p94 = por %p92, %p93
    %s96 = sadd.s32 %s95, 1
    %p99 = scmp.eq.s32.totalorder %s19, 1
    %p100 = scmp.ne.s32.totalorder %s95, %s97
    %p101 = scmp.eq.s32.totalorder %s19, 0
    %p102 = por %p100, %p101
    %p103 = scmp.ne.s32.totalorder %s95, %s97
    %p104 = scmp.eq.s32.totalorder %s24, 1
    %p105 = por %p103, %p104
    %p106 = scmp.ne.s32.totalorder %s97, %s98
    %p107 = scmp.eq.s32.totalorder %s24, 0
    %p108 = por %p106, %p107
    %p109 = scmp.ne.s32.totalorder %s97, %s98
    %p110 = scmp.eq.s32.totalorder %s25, 1
    %p111 = por %p109, %p110
    %p113 = scmp.ne.s32.totalorder %s98, %s112
    %p114 = scmp.eq.s32.totalorder %s25, 0
    %p115 = por %p113, %p114
    %s117 = sadd.s32 %s116, 1
    %p120 = scmp.eq.s32.totalorder %s19, 1
    %p121 = scmp.ne.s32.totalorder %s116, %s118
    %p122 = scmp.eq.s32.totalorder %s19, 0
    %p123 = por %p121, %p122
    %p124 = scmp.ne.s32.totalorder %s116, %s118
    %p125 = scmp.eq.s32.totalorder %s24, 1
    %p126 = por %p124, %p125
    %p127 = scmp.ne.s32.totalorder %s118, %s119
    %p128 = scmp.eq.s32.totalorder %s24, 0
    %p129 = por %p127, %p128
    %p130 = scmp.ne.s32.totalorder %s118, %s119
    %p131 = scmp.eq.s32.totalorder %s25, 1
    %p132 = por %p130, %p131
    %p134 = scmp.ne.s32.totalorder %s119, %s133
    %p135 = scmp.eq.s32.totalorder %s25, 0
    %p136 = por %p134, %p135
    %s138 = sadd.s32 %s137, 1
    %p141 = scmp.eq.s32.totalorder %s19, 1
    %p142 = scmp.ne.s32.totalorder %s137, %s139
    %p143 = scmp.eq.s32.totalorder %s19, 0
    %p144 = por %p142, %p143
    %p145 = scmp.ne.s32.totalorder %s137, %s139
    %p146 = scmp.eq.s32.totalorder %s24, 1
    %p147 = por %p145, %p146
    %p148 = scmp.ne.s32.totalorder %s139, %s140
    %p149 = scmp.eq.s32.totalorder %s24, 0
    %p150 = por %p148, %p149
    %p151 = scmp.ne.s32.totalorder %s139, %s140
    %p152 = scmp.eq.s32.totalorder %s25, 1
    %p153 = por %p151, %p152
    %p155 = scmp.ne.s32.totalorder %s140, %s154
    %p156 = scmp.eq.s32.totalorder %s25, 0
    %p157 = por %p155, %p156
    %s159 = sadd.s32 %s158, 1
    %p162 = scmp.eq.s32.totalorder %s19, 1
    %p163 = scmp.ne.s32.totalorder %s158, %s160
    %p164 = scmp.eq.s32.totalorder %s19, 0
    %p165 = por %p163, %p164
    %p166 = scmp.ne.s32.totalorder %s158, %s160
    %p167 = scmp.eq.s32.totalorder %s24, 1
    %p168 = por %p166, %p167
    %p169 = scmp.ne.s32.totalorder %s160, %s161
    %p170 = scmp.eq.s32.totalorder %s24, 0
    %p171 = por %p169, %p170
    %p172 = scmp.ne.s32.totalorder %s160, %s161
    %p173 = scmp.eq.s32.totalorder %s25, 1
    %p174 = por %p172, %p173
    %p176 = scmp.ne.s32.totalorder %s161, %s175
    %p177 = scmp.eq.s32.totalorder %s25, 0
    %p178 = por %p176, %p177
    %s180 = sadd.s32 %s179, 1
    %p183 = scmp.eq.s32.totalorder %s19, 1
    %p184 = scmp.ne.s32.totalorder %s179, %s181
    %p185 = scmp.eq.s32.totalorder %s19, 0
    %p186 = por %p184, %p185
    %p187 = scmp.ne.s32.totalorder %s179, %s181
    %p188 = scmp.eq.s32.totalorder %s24, 1
    %p189 = por %p187, %p188
    %p190 = scmp.ne.s32.totalorder %s181, %s182
    %p191 = scmp.eq.s32.totalorder %s24, 0
    %p192 = por %p190, %p191
    %p193 = scmp.ne.s32.totalorder %s181, %s182
    %p194 = scmp.eq.s32.totalorder %s25, 1
    %p195 = por %p193, %p194
    %p197 = scmp.ne.s32.totalorder %s182, %s196
    %p198 = scmp.eq.s32.totalorder %s25, 0
    %p199 = por %p197, %p198
    %s200 = ssub.s32 %s19, %s26
    %p201 = scmp.eq.s32.totalorder %s200, 0
    %s203 = sadd.s32 %s202, 1
    %s204 = scalar_select %p201, %s202, %s203
    %p207 = pneg %p201
    %p208 = scmp.eq.s32.totalorder %s19, 1
    %p209 = por %p207, %p208
    %p210 = scmp.ne.s32.totalorder %s202, %s205
    %p211 = scmp.eq.s32.totalorder %s19, 0
    %p212 = por %p210, %p211
    %p213 = scmp.ne.s32.totalorder %s202, %s205
    %p214 = scmp.eq.s32.totalorder %s24, 1
    %p215 = por %p213, %p214
    %p216 = scmp.ne.s32.totalorder %s205, %s206
    %p217 = scmp.eq.s32.totalorder %s24, 0
    %p218 = por %p216, %p217
    %p219 = scmp.ne.s32.totalorder %s205, %s206
    %p220 = scmp.eq.s32.totalorder %s25, 1
    %p221 = por %p219, %p220
    %p223 = scmp.ne.s32.totalorder %s206, %s222
    %p224 = scmp.eq.s32.totalorder %s25, 0
    %p225 = por %p223, %p224
    %s226 = ssub.s32 %s19, %s26
    %p227 = scmp.eq.s32.totalorder %s226, 0
    %s229 = sadd.s32 %s228, 1
    %s230 = scalar_select %p227, %s228, %s229
    %p233 = pneg %p227
    %p234 = scmp.eq.s32.totalorder %s19, 1
    %p235 = por %p233, %p234
    %p236 = scmp.ne.s32.totalorder %s228, %s231
    %p237 = scmp.eq.s32.totalorder %s19, 0
    %p238 = por %p236, %p237
    %p239 = scmp.ne.s32.totalorder %s228, %s231
    %p240 = scmp.eq.s32.totalorder %s24, 1
    %p241 = por %p239, %p240
    %p242 = scmp.ne.s32.totalorder %s231, %s232
    %p243 = scmp.eq.s32.totalorder %s24, 0
    %p244 = por %p242, %p243
    %p245 = scmp.ne.s32.totalorder %s231, %s232
    %p246 = scmp.eq.s32.totalorder %s25, 1
    %p247 = por %p245, %p246
    %p249 = scmp.ne.s32.totalorder %s232, %s248
    %p250 = scmp.eq.s32.totalorder %s25, 0
    %p251 = por %p249, %p250
    %s252 = ssub.s32 %s19, %s26
    %p253 = scmp.eq.s32.totalorder %s252, 0
    %s255 = sadd.s32 %s254, 1
    %s256 = scalar_select %p253, %s254, %s255
    %p259 = pneg %p253
    %p260 = scmp.eq.s32.totalorder %s19, 1
    %p261 = por %p259, %p260
    %p262 = scmp.ne.s32.totalorder %s254, %s257
    %p263 = scmp.eq.s32.totalorder %s19, 0
    %p264 = por %p262, %p263
    %p265 = scmp.ne.s32.totalorder %s254, %s257
    %p266 = scmp.eq.s32.totalorder %s24, 1
    %p267 = por %p265, %p266
    %p268 = scmp.ne.s32.totalorder %s257, %s258
    %p269 = scmp.eq.s32.totalorder %s24, 0
    %p270 = por %p268, %p269
    %p271 = scmp.ne.s32.totalorder %s257, %s258
    %p272 = scmp.eq.s32.totalorder %s25, 1
    %p273 = por %p271, %p272
    %p275 = scmp.ne.s32.totalorder %s258, %s274
    %p276 = scmp.eq.s32.totalorder %s25, 0
    %p277 = por %p275, %p276
    %p278 = scmp.le.s32.totalorder 1, %s19
    %p279 = scmp.lt.s32.totalorder %s19, 3
    %p280 = pnand %p278, %p279
    %p281 = pneg %p280
    // Predicated region
    $region9: #{tpu_custom_call.1} parent=5 // pred_check
      _
    $region10: #{tpu_custom_call.1} parent=5 // pred_check_branch
      %283 = sbr.rel (%p280) target = $region12
    $region11: #{tpu_custom_call.1} parent=5 // pred_region
      %s284 = ssub.s32 %s19, 1
      // Predicated region
      $region13: #{tpu_custom_call.1} parent=11 // pred_check
        %p285 = pneg %p66
      $region14: #{tpu_custom_call.1} parent=11 // pred_check_branch
        %287 = sbr.rel (%p285) target = $region16
      $region15: #{tpu_custom_call.1} parent=11 // pred_region
        _
      $region16: #{tpu_custom_call.1} parent=11 // pred_fallthru
        _
      // Predicated region
      $region17: #{tpu_custom_call.1} parent=11 // pred_check
        %p288 = pneg %p87
      $region18: #{tpu_custom_call.1} parent=11 // pred_check_branch
        %290 = sbr.rel (%p288) target = $region20
      $region19: #{tpu_custom_call.1} parent=11 // pred_region
        _
      $region20: #{tpu_custom_call.1} parent=11 // pred_fallthru
        _
      // Predicated region
      $region21: #{tpu_custom_call.1} parent=11 // pred_check
        %p291 = pneg %p108
      $region22: #{tpu_custom_call.1} parent=11 // pred_check_branch
        %293 = sbr.rel (%p291) target = $region24
      $region23: #{tpu_custom_call.1} parent=11 // pred_region
        _
      $region24: #{tpu_custom_call.1} parent=11 // pred_fallthru
        _
      // Predicated region
      $region25: #{tpu_custom_call.1} parent=11 // pred_check
        %p294 = pneg %p129
      $region26: #{tpu_custom_call.1} parent=11 // pred_check_branch
        %296 = sbr.rel (%p294) target = $region28
      $region27: #{tpu_custom_call.1} parent=11 // pred_region
        _
      $region28: #{tpu_custom_call.1} parent=11 // pred_fallthru
        _
      // Predicated region
      $region29: #{tpu_custom_call.1} parent=11 // pred_check
        %p297 = pneg %p150
      $region30: #{tpu_custom_call.1} parent=11 // pred_check_branch
        %299 = sbr.rel (%p297) target = $region32
      $region31: #{tpu_custom_call.1} parent=11 // pred_region
        _
      $region32: #{tpu_custom_call.1} parent=11 // pred_fallthru
        _
      // Predicated region
      $region33: #{tpu_custom_call.1} parent=11 // pred_check
        %p300 = pneg %p171
      $region34: #{tpu_custom_call.1} parent=11 // pred_check_branch
        %302 = sbr.rel (%p300) target = $region36
      $region35: #{tpu_custom_call.1} parent=11 // pred_region
        _
      $region36: #{tpu_custom_call.1} parent=11 // pred_fallthru
        _
      // Predicated region
      $region37: #{tpu_custom_call.1} parent=11 // pred_check
        %p303 = pneg %p192
      $region38: #{tpu_custom_call.1} parent=11 // pred_check_branch
        %305 = sbr.rel (%p303) target = $region40
      $region39: #{tpu_custom_call.1} parent=11 // pred_region
        _
      $region40: #{tpu_custom_call.1} parent=11 // pred_fallthru
        _
    $region12: #{tpu_custom_call.1} parent=5 // pred_fallthru
      _
    %p306 = scmp.lt.s32.totalorder %s19, 2
    // Predicated region
    $region41: #{tpu_custom_call.1} parent=5 // pred_check
      %p307 = pneg %p306
    $region42: #{tpu_custom_call.1} parent=5 // pred_check_branch
      %309 = sbr.rel (%p307) target = $region44
    $region43: #{tpu_custom_call.1} parent=5 // pred_region
      // Predicated region
      $region45: #{tpu_custom_call.1} parent=43 // pred_check
        %p310 = pneg %p39
      $region46: #{tpu_custom_call.1} parent=43 // pred_check_branch
        %312 = sbr.rel (%p310) target = $region48
      $region47: #{tpu_custom_call.1} parent=43 // pred_region
        %s313 = smul.u32 3, %s19
        %p314 = scmp.lt.s32.totalorder %s313, 5
        %s315 = scalar_select %p314, %s313, 5
        %s316 = smul.addr %s315, 8
        %s317 = scalar_lea.vmem %s0, %s316
        %s318 = smul.u32 3, %s19
      $region48: #{tpu_custom_call.1} parent=43 // pred_fallthru
        _
    $region44: #{tpu_custom_call.1} parent=5 // pred_fallthru
      _
    %p319 = scmp.le.s32.totalorder 1, %s19
    %p320 = scmp.lt.s32.totalorder %s19, 3
    %p321 = pnand %p319, %p320
    %p322 = pneg %p321
    // Predicated region
    $region49: #{tpu_custom_call.1} parent=5 // pred_check
      _
    $region50: #{tpu_custom_call.1} parent=5 // pred_check_branch
      %324 = sbr.rel (%p321) target = $region52
    $region51: #{tpu_custom_call.1} parent=5 // pred_region
      %s325 = ssub.s32 %s19, 1
      %s326 = smul.u32 3, %s24
      %p327 = scmp.lt.s32.totalorder %s326, 5
      %s328 = scalar_select %p327, %s326, 5
      %s329 = smul.addr %s328, 8
      %s330 = scalar_lea.vmem %s0, %s329
      %p331 = pneg %p45
      %p332 = pneg %p42
      %p333 = pneg %p66
      %p334 = pneg %p63
      %p335 = pneg %p87
      %p336 = pneg %p84
      %p337 = pneg %p108
      %p338 = pneg %p105
      %p339 = pneg %p129
      %p340 = pneg %p126
      %p341 = pneg %p150
      %p342 = pneg %p147
      %p343 = pneg %p171
      %p344 = pneg %p168
      %p345 = pneg %p192
      %p346 = pneg %p189
      %p347 = pneg %p218
      %p348 = pneg %p215
      %s349 = smul.u32 3, %s24
      %p350 = scmp.lt.s32.totalorder %s349, 5
      %s351 = scalar_select %p350, %s349, 5
      %s352 = smul.addr %s351, 8
      %s353 = scalar_lea.vmem %s8, %s352
      %p354 = pneg %p244
      %p355 = pneg %p241
      %s356 = smul.u32 3, %s24
      %p357 = scmp.lt.s32.totalorder %s356, 5
      %s358 = scalar_select %p357, %s356, 5
      %s359 = smul.addr %s358, 8
      %s360 = scalar_lea.vmem %s9, %s359
      %p361 = pneg %p270
      %p362 = pneg %p267
      %s363 = smul.u32 3, %s24
      %p364 = scmp.lt.s32.totalorder %s363, 5
      %s365 = scalar_select %p364, %s363, 5
      %s366 = smul.addr %s365, 8
      %s367 = scalar_lea.vmem %s10, %s366
      %s368 = smul.u32 3, %s24
      %p369 = scmp.lt.s32.totalorder %s368, 5
      %s370 = scalar_select %p369, %s368, 5
      %s371 = smul.addr %s370, 8
      %s372 = scalar_lea.vmem %s0, %s371
      %s373 = smul.u32 3, %s24
      %s374 = smul.u32 3, %s24
      %p375 = scmp.lt.s32.totalorder %s374, 5
      %s376 = scalar_select %p375, %s374, 5
      %s377 = smul.addr %s376, 8
      %s378 = scalar_lea.vmem %s8, %s377
      %s379 = smul.u32 3, %s24
      %s380 = smul.u32 3, %s24
      %p381 = scmp.lt.s32.totalorder %s380, 5
      %s382 = scalar_select %p381, %s380, 5
      %s383 = smul.addr %s382, 8
      %s384 = scalar_lea.vmem %s9, %s383
      %s385 = smul.u32 3, %s24
      %s386 = smul.u32 3, %s24
      %p387 = scmp.lt.s32.totalorder %s386, 5
      %s388 = scalar_select %p387, %s386, 5
      %s389 = smul.addr %s388, 8
      %s390 = scalar_lea.vmem %s10, %s389
      %s391 = smul.u32 3, %s24
      %v392 = vld [vmem:[%s372] sm:$0xff]
      %v393 = vld [vmem:[%s372 + $0x8] sm:$0xff]
      %v394 = vld [vmem:[%s372 + $0x10] sm:$0xff]
      %v395 = vld [vmem:[%s1] sm:$0xff]
      %v396 = vld [vmem:[%s1 + $0x8] sm:$0xff]
      %v397 = vld [vmem:[%s1 + $0x10] sm:$0xff]
      %v398 = vld [vmem:[%s1 + $0x18] sm:$0xff]
      %v399 = vld [vmem:[%s1 + $0x20] sm:$0xf]
      %v400 = vld [vmem:[%s1 + $0x28] sm:$0xf]
      %v401 = vld [vmem:[%s2] sm:$0x3]
      %v403 = vlaneseq
      %v404 = vshrl.u32 %v403, 7
      %v405 = vsub.s32 0, %v404
      %v406 = vrot.slane %v401, %v405
      %v407 = vlaneseq
      %v408 = vshrl.u32 %v407, 7
      %v409 = vsub.s32 1, %v408
      %v410 = vrot.slane %v401, %v409
      %vm413 = vcmask 162816
      %v415 = vsel %vm413, %v392, 0
      %v418 = vsel %vm413, %v393, 0
      %v421 = vsel %vm413, %v394, 0
      %vm423 = vcmask 1043456
      %v425 = vsel %vm423, %v399, 0
      %v428 = vsel %vm423, %v400, 0
      %430 = vmatprep.subr.mxu0 %v396
      %431 = vmatpush1.msra.mxu0 %v395
      %432 = vmatprep.subr.mxu0 %v398
      %433 = vmatpush1.msra.mxu0 %v397
      %434 = vmatprep.subr.mxu0 %v428
      %435 = vmatpush1.msra.mxu0 %v425
      %436 = vmatprep.subr.mxu0 0.0
      %437 = vmatpush1.msra.mxu0 0.0
      %438 = vmatprep.subr.mxu0 0.0
      %439 = vmatpush1.msra.mxu0 0.0
      %440 = vmatprep.subr.mxu0 0.0
      %441 = vmatpush1.msra.mxu0 0.0
      %442 = vmatprep.subr.mxu0 0.0
      %443 = vmatpush1.msra.mxu0 0.0
      %444 = vmatprep.subr.mxu0 0.0
      %445 = vmatpush1.msra.mxu0 0.0
      %446 = vmatprep.subr.mxu0 0.0
      %447 = vmatpush1.msra.mxu0 0.0
      %448 = vmatprep.subr.mxu0 0.0
      %449 = vmatpush1.msra.mxu0 0.0
      %450 = vmatprep.subr.mxu0 0.0
      %451 = vmatpush1.msra.mxu0 0.0
      %452 = vmatprep.subr.mxu0 0.0
      %453 = vmatpush1.msra.mxu0 0.0
      %454 = vmatprep.subr.mxu0 0.0
      %455 = vmatpush1.msra.mxu0 0.0
      %456 = vmatprep.subr.mxu0 0.0
      %457 = vmatpush1.msra.mxu0 0.0
      %458 = vmatprep.subr.mxu0 0.0
      %459 = vmatpush1.msra.mxu0 0.0
      %460 = vmatprep.subr.mxu0 0.0
      %461 = vmatpush1.msra.mxu0 0.0
      %462 = vmatprep.subr.mxu0 0.0
      %463 = vmatpush1.msra.mxu0 0.0
      %464 = vmatprep.subr.mxu0 0.0
      %465 = vmatpush1.msra.mxu0 0.0
      %466 = vmatprep.subr.mxu0 0.0
      %467 = vmatpush1.msra.mxu0 0.0
      %468 = vmatprep.subr.mxu0 0.0
      %469 = vmatpush1.msra.mxu0 0.0
      %470 = vmatprep.subr.mxu0 0.0
      %471 = vmatpush1.msra.mxu0 0.0
      %472 = vmatprep.subr.mxu0 0.0
      %473 = vmatpush1.msra.mxu0 0.0
      %474 = vmatprep.subr.mxu0 0.0
      %475 = vmatpush1.msra.mxu0 0.0
      %476 = vmatprep.subr.mxu0 0.0
      %477 = vmatpush1.msra.mxu0 0.0
      %478 = vmatprep.subr.mxu0 0.0
      %479 = vmatpush1.msra.mxu0 0.0
      %480 = vmatprep.subr.mxu0 0.0
      %481 = vmatpush1.msra.mxu0 0.0
      %482 = vmatprep.subr.mxu0 0.0
      %483 = vmatpush1.msra.mxu0 0.0
      %484 = vmatprep.subr.mxu0 0.0
      %485 = vmatpush1.msra.mxu0 0.0
      %486 = vmatprep.subr.mxu0 0.0
      %487 = vmatpush1.msra.mxu0 0.0
      %488 = vmatprep.subr.mxu0 0.0
      %489 = vmatpush1.msra.mxu0 0.0
      %490 = vmatprep.subr.mxu0 0.0
      %491 = vmatpush1.msra.mxu0 0.0
      %492 = vmatprep.subr.mxu0 0.0
      %493 = vmatpush1.msra.mxu0 0.0
      %494 = vmatprep.mubr.f32.mxu0 0.0
      %495 = vmatmul.mubr.f32.gmra.mrb[0].mxu0 %v415
      %v496 = vpop.f32.mrb[0].mxu0
      %v497 = vadd.f32 %v406, %v496
      %v498 = vpop.f32.mrb[0].mxu0
      %v499 = vadd.f32 %v410, %v498
      %500 = vmatprep.mubr.f32.mxu0 0.0
      %501 = vmatmul.mubr.f32.gmra.mrb[0].mxu0 %v418
      %v502 = vpop.f32.mrb[0].mxu0
      %v503 = vadd.f32 %v406, %v502
      %v504 = vpop.f32.mrb[0].mxu0
      %v505 = vadd.f32 %v410, %v504
      %506 = vmatprep.mubr.f32.mxu0 0.0
      %507 = vmatmul.mubr.f32.gmra.mrb[0].mxu0 %v421
      %v508 = vpop.f32.mrb[0].mxu0
      %v509 = vadd.f32 %v406, %v508
      %v510 = vpop.f32.mrb[0].mxu0
      %v511 = vadd.f32 %v410, %v510
      %512 = vdwg.mxu0
      %v513 = vmax.f32 %v497, 0.0
      %v514 = vmax.f32 %v503, 0.0
      %v515 = vmax.f32 %v509, 0.0
      %v516 = vld [vmem:[%s3] sm:$0xff]
      %v517 = vld [vmem:[%s3 + $0x8] sm:$0xff]
      %v518 = vld [vmem:[%s3 + $0x10] sm:$0xff]
      %v519 = vld [vmem:[%s3 + $0x18] sm:$0xff]
      %v520 = vld [vmem:[%s3 + $0x20] sm:$0xff]
      %v521 = vld [vmem:[%s3 + $0x28] sm:$0xff]
      %v522 = vld [vmem:[%s3 + $0x30] sm:$0xff]
      %v523 = vld [vmem:[%s3 + $0x38] sm:$0xff]
      %v524 = vld [vmem:[%s3 + $0x40] sm:$0xff]
      %v525 = vld [vmem:[%s3 + $0x48] sm:$0xff]
      %v526 = vld [vmem:[%s3 + $0x50] sm:$0xff]
      %v527 = vld [vmem:[%s3 + $0x58] sm:$0xff]
      %v528 = vld [vmem:[%s3 + $0x60] sm:$0xff]
      %v529 = vld [vmem:[%s3 + $0x68] sm:$0xff]
      %v530 = vld [vmem:[%s3 + $0x70] sm:$0xff]
      %v531 = vld [vmem:[%s3 + $0x78] sm:$0xff]
      %v532 = vld [vmem:[%s4] sm:$0x1]
      %v534 = vlaneseq
      %v535 = vshrl.u32 %v534, 7
      %v536 = vsub.s32 0, %v535
      %v537 = vrot.slane %v532, %v536
      %539 = vmatprep.subr.mxu0 0.0
      %540 = vmatpush1.msra.mxu0 %v516
      %541 = vmatprep.subr.mxu0 0.0
      %542 = vmatpush1.msra.mxu0 %v517
      %543 = vmatprep.subr.mxu0 0.0
      %544 = vmatpush1.msra.mxu0 %v518
      %545 = vmatprep.subr.mxu0 0.0
      %546 = vmatpush1.msra.mxu0 %v519
      %547 = vmatprep.subr.mxu0 0.0
      %548 = vmatpush1.msra.mxu0 %v520
      %549 = vmatprep.subr.mxu0 0.0
      %550 = vmatpush1.msra.mxu0 %v521
      %551 = vmatprep.subr.mxu0 0.0
      %552 = vmatpush1.msra.mxu0 %v522
      %553 = vmatprep.subr.mxu0 0.0
      %554 = vmatpush1.msra.mxu0 %v523
      %555 = vmatprep.subr.mxu0 0.0
      %556 = vmatpush1.msra.mxu0 %v524
      %557 = vmatprep.subr.mxu0 0.0
      %558 = vmatpush1.msra.mxu0 %v525
      %559 = vmatprep.subr.mxu0 0.0
      %560 = vmatpush1.msra.mxu0 %v526
      %561 = vmatprep.subr.mxu0 0.0
      %562 = vmatpush1.msra.mxu0 %v527
      %563 = vmatprep.subr.mxu0 0.0
      %564 = vmatpush1.msra.mxu0 %v528
      %565 = vmatprep.subr.mxu0 0.0
      %566 = vmatpush1.msra.mxu0 %v529
      %567 = vmatprep.subr.mxu0 0.0
      %568 = vmatpush1.msra.mxu0 %v530
      %569 = vmatprep.subr.mxu0 0.0
      %570 = vmatpush1.msra.mxu0 %v531
      %571 = vmatprep.subr.mxu0 0.0
      %572 = vmatpush1.msra.mxu0 0.0
      %573 = vmatprep.subr.mxu0 0.0
      %574 = vmatpush1.msra.mxu0 0.0
      %575 = vmatprep.subr.mxu0 0.0
      %576 = vmatpush1.msra.mxu0 0.0
      %577 = vmatprep.subr.mxu0 0.0
      %578 = vmatpush1.msra.mxu0 0.0
      %579 = vmatprep.subr.mxu0 0.0
      %580 = vmatpush1.msra.mxu0 0.0
      %581 = vmatprep.subr.mxu0 0.0
      %582 = vmatpush1.msra.mxu0 0.0
      %583 = vmatprep.subr.mxu0 0.0
      %584 = vmatpush1.msra.mxu0 0.0
      %585 = vmatprep.subr.mxu0 0.0
      %586 = vmatpush1.msra.mxu0 0.0
      %587 = vmatprep.subr.mxu0 0.0
      %588 = vmatpush1.msra.mxu0 0.0
      %589 = vmatprep.subr.mxu0 0.0
      %590 = vmatpush1.msra.mxu0 0.0
      %591 = vmatprep.subr.mxu0 0.0
      %592 = vmatpush1.msra.mxu0 0.0
      %593 = vmatprep.subr.mxu0 0.0
      %594 = vmatpush1.msra.mxu0 0.0
      %595 = vmatprep.subr.mxu0 0.0
      %596 = vmatpush1.msra.mxu0 0.0
      %597 = vmatprep.subr.mxu0 0.0
      %598 = vmatpush1.msra.mxu0 0.0
      %599 = vmatprep.subr.mxu0 0.0
      %600 = vmatpush1.msra.mxu0 0.0
      %601 = vmatprep.subr.mxu0 0.0
      %602 = vmatpush1.msra.mxu0 0.0
      %603 = vmatprep.mubr.f32.mxu0 0.0
      %604 = vmatmul.mubr.f32.gmra.mrb[0].mxu0 %v513
      %v605 = vpop.f32.mrb[0].mxu0
      %v606 = vadd.f32 %v537, %v605
      %v607 = vpop.f32.mrb[0].mxu0
      %608 = vmatprep.mubr.f32.mxu0 0.0
      %609 = vmatmul.mubr.f32.gmra.mrb[0].mxu0 %v514
      %v610 = vpop.f32.mrb[0].mxu0
      %v611 = vadd.f32 %v537, %v610
      %v612 = vpop.f32.mrb[0].mxu0
      %613 = vmatprep.mubr.f32.mxu0 0.0
      %614 = vmatmul.mubr.f32.gmra.mrb[0].mxu0 %v515
      %v615 = vpop.f32.mrb[0].mxu0
      %v616 = vadd.f32 %v537, %v615
      %v617 = vpop.f32.mrb[0].mxu0
      %618 = vdwg.mxu0
      %v619 = vmax.f32 %v606, -20.0
      %v620 = vmax.f32 %v611, -20.0
      %v621 = vmax.f32 %v616, -20.0
      %v622 = vmin.f32 %v619, 2.0
      %v623 = vmin.f32 %v620, 2.0
      %v624 = vmin.f32 %v621, 2.0
      %v625 = vmul.f32 %v622, 1.442695
      %v626 = vpow.pop %v625
      %v627 = vmul.f32 %v623, 1.442695
      %v628 = vpow.pop %v627
      %v629 = vmul.f32 %v624, 1.442695
      %v630 = vpow.pop %v629
      %631 = vrot.lane.b32.xlu0 %v392, 116
      %v632 = vpop.permute.xlu0 %631
      %633 = vrot.lane.b32.xlu0 %v393, 116
      %v634 = vpop.permute.xlu0 %633
      %635 = vrot.lane.b32.xlu0 %v394, 116
      %v636 = vpop.permute.xlu0 %635
      %v640 = vmul.f32 %v626, %v632
      %v641 = vmul.f32 %v628, %v634
      %v642 = vmul.f32 %v630, %v636
      %646 = vrot.lane.b32.xlu0 %v640, 124
      %v647 = vpop.permute.xlu0 %646
      %648 = vrot.lane.b32.xlu0 %v641, 124
      %v649 = vpop.permute.xlu0 %648
      %650 = vrot.lane.b32.xlu0 %v642, 124
      %v651 = vpop.permute.xlu0 %650
      %v655 = vadd.f32 %v606, %v647
      %v656 = vadd.f32 %v611, %v649
      %v657 = vadd.f32 %v616, %v651
      %v658 = vmul.f32 %v392, %v392
      %v659 = vmul.f32 %v393, %v393
      %v660 = vmul.f32 %v394, %v394
      %v661 = vmul.f32 %v658, -0.5
      %v662 = vmul.f32 %v659, -0.5
      %v663 = vmul.f32 %v660, -0.5
      %667 = vrot.lane.b32.xlu0 %v622, 12
      %v668 = vpop.permute.xlu0 %667
      %669 = vrot.lane.b32.xlu0 %v623, 12
      %v670 = vpop.permute.xlu0 %669
      %671 = vrot.lane.b32.xlu0 %v624, 12
      %v672 = vpop.permute.xlu0 %671
      %v676 = vsub.f32 %v661, %v668
      %v677 = vsub.f32 %v662, %v670
      %v678 = vsub.f32 %v663, %v672
      %v679 = vsub.f32 %v676, 0.9189385
      %v680 = vsub.f32 %v677, 0.9189385
      %v681 = vsub.f32 %v678, 0.9189385
      %685 = vrot.lane.b32.xlu0 %v679, 112
      %v686 = vpop.permute.xlu0 %685
      %687 = vrot.lane.b32.xlu0 %v680, 112
      %v688 = vpop.permute.xlu0 %687
      %689 = vrot.lane.b32.xlu0 %v681, 112
      %v690 = vpop.permute.xlu0 %689
      %vm694 = vcmask 31744
      %v695 = vsel %vm694, %v686, 0.0
      %696 = vadd.xlane.f32.xlu0 %v695
      %v697 = vpop.xlane.xlu0 %696
      %v698 = vsel %vm694, %v688, 0.0
      %699 = vadd.xlane.f32.xlu0 %v698
      %v700 = vpop.xlane.xlu0 %699
      %v701 = vsel %vm694, %v690, 0.0
      %702 = vadd.xlane.f32.xlu0 %v701
      %v703 = vpop.xlane.xlu0 %702
      %v704 = vld [vmem:[%s5] sm:$0xf]
      %v706 = vsel %vm694, %v655, 0
      %v709 = vsel %vm694, %v656, 0
      %v712 = vsel %vm694, %v657, 0
      %v715 = vsel %vm423, %v704, 0
      %717 = vmatprep.subr.mxu0 0.0
      %718 = vmatpush1.msra.mxu0 %v715
      %719 = vmatprep.subr.mxu0 0.0
      %720 = vmatpush1.msra.mxu0 0.0
      %721 = vmatprep.subr.mxu0 0.0
      %722 = vmatpush1.msra.mxu0 0.0
      %723 = vmatprep.subr.mxu0 0.0
      %724 = vmatpush1.msra.mxu0 0.0
      %725 = vmatprep.subr.mxu0 0.0
      %726 = vmatpush1.msra.mxu0 0.0
      %727 = vmatprep.subr.mxu0 0.0
      %728 = vmatpush1.msra.mxu0 0.0
      %729 = vmatprep.subr.mxu0 0.0
      %730 = vmatpush1.msra.mxu0 0.0
      %731 = vmatprep.subr.mxu0 0.0
      %732 = vmatpush1.msra.mxu0 0.0
      %733 = vmatprep.subr.mxu0 0.0
      %734 = vmatpush1.msra.mxu0 0.0
      %735 = vmatprep.subr.mxu0 0.0
      %736 = vmatpush1.msra.mxu0 0.0
      %737 = vmatprep.subr.mxu0 0.0
      %738 = vmatpush1.msra.mxu0 0.0
      %739 = vmatprep.subr.mxu0 0.0
      %740 = vmatpush1.msra.mxu0 0.0
      %741 = vmatprep.subr.mxu0 0.0
      %742 = vmatpush1.msra.mxu0 0.0
      %743 = vmatprep.subr.mxu0 0.0
      %744 = vmatpush1.msra.mxu0 0.0
      %745 = vmatprep.subr.mxu0 0.0
      %746 = vmatpush1.msra.mxu0 0.0
      %747 = vmatprep.subr.mxu0 0.0
      %748 = vmatpush1.msra.mxu0 0.0
      %749 = vmatprep.subr.mxu0 0.0
      %750 = vmatpush1.msra.mxu0 0.0
      %751 = vmatprep.subr.mxu0 0.0
      %752 = vmatpush1.msra.mxu0 0.0
      %753 = vmatprep.subr.mxu0 0.0
      %754 = vmatpush1.msra.mxu0 0.0
      %755 = vmatprep.subr.mxu0 0.0
      %756 = vmatpush1.msra.mxu0 0.0
      %757 = vmatprep.subr.mxu0 0.0
      %758 = vmatpush1.msra.mxu0 0.0
      %759 = vmatprep.subr.mxu0 0.0
      %760 = vmatpush1.msra.mxu0 0.0
      %761 = vmatprep.subr.mxu0 0.0
      %762 = vmatpush1.msra.mxu0 0.0
      %763 = vmatprep.subr.mxu0 0.0
      %764 = vmatpush1.msra.mxu0 0.0
      %765 = vmatprep.subr.mxu0 0.0
      %766 = vmatpush1.msra.mxu0 0.0
      %767 = vmatprep.subr.mxu0 0.0
      %768 = vmatpush1.msra.mxu0 0.0
      %769 = vmatprep.subr.mxu0 0.0
      %770 = vmatpush1.msra.mxu0 0.0
      %771 = vmatprep.subr.mxu0 0.0
      %772 = vmatpush1.msra.mxu0 0.0
      %773 = vmatprep.subr.mxu0 0.0
      %774 = vmatpush1.msra.mxu0 0.0
      %775 = vmatprep.subr.mxu0 0.0
      %776 = vmatpush1.msra.mxu0 0.0
      %777 = vmatprep.subr.mxu0 0.0
      %778 = vmatpush1.msra.mxu0 0.0
      %779 = vmatprep.subr.mxu0 0.0
      %780 = vmatpush1.msra.mxu0 0.0
      %781 = vmatprep.mubr.f32.mxu0 0.0
      %782 = vmatmul.mubr.f32.gmra.mrb[0].mxu0 %v706
      %v783 = vpop.f32.mrb[0].mxu0
      %v784 = vadd.f32 0.0, %v783
      %v785 = vpop.f32.mrb[0].mxu0
      %786 = vmatprep.mubr.f32.mxu0 0.0
      %787 = vmatmul.mubr.f32.gmra.mrb[0].mxu0 %v709
      %v788 = vpop.f32.mrb[0].mxu0
      %v789 = vadd.f32 0.0, %v788
      %v790 = vpop.f32.mrb[0].mxu0
      %791 = vmatprep.mubr.f32.mxu0 0.0
      %792 = vmatmul.mubr.f32.gmra.mrb[0].mxu0 %v712
      %v793 = vpop.f32.mrb[0].mxu0
      %v794 = vadd.f32 0.0, %v793
      %v795 = vpop.f32.mrb[0].mxu0
      %796 = vdwg.mxu0
      %v797 = vadd.f32 %v499, %v784
      %v798 = vadd.f32 %v505, %v789
      %v799 = vadd.f32 %v511, %v794
      %v800 = vmax.f32 %v797, 0.0
      %v801 = vmax.f32 %v798, 0.0
      %v802 = vmax.f32 %v799, 0.0
      %v803 = vld [vmem:[%s6] sm:$0xff]
      %v804 = vld [vmem:[%s6 + $0x8] sm:$0xff]
      %v805 = vld [vmem:[%s6 + $0x10] sm:$0xff]
      %v806 = vld [vmem:[%s6 + $0x18] sm:$0xff]
      %v807 = vld [vmem:[%s6 + $0x20] sm:$0xff]
      %v808 = vld [vmem:[%s6 + $0x28] sm:$0xff]
      %v809 = vld [vmem:[%s6 + $0x30] sm:$0xff]
      %v810 = vld [vmem:[%s6 + $0x38] sm:$0xff]
      %v811 = vld [vmem:[%s6 + $0x40] sm:$0xff]
      %v812 = vld [vmem:[%s6 + $0x48] sm:$0xff]
      %v813 = vld [vmem:[%s6 + $0x50] sm:$0xff]
      %v814 = vld [vmem:[%s6 + $0x58] sm:$0xff]
      %v815 = vld [vmem:[%s6 + $0x60] sm:$0xff]
      %v816 = vld [vmem:[%s6 + $0x68] sm:$0xff]
      %v817 = vld [vmem:[%s6 + $0x70] sm:$0xff]
      %v818 = vld [vmem:[%s6 + $0x78] sm:$0xff]
      %v819 = vld [vmem:[#allocation2] sm:$0x1]
      %v821 = vlaneseq
      %v822 = vshrl.u32 %v821, 7
      %v823 = vsub.s32 0, %v822
      %v824 = vrot.slane %v819, %v823
      %826 = vmatprep.subr.mxu0 0.0
      %827 = vmatpush1.msra.mxu0 %v803
      %828 = vmatprep.subr.mxu0 0.0
      %829 = vmatpush1.msra.mxu0 %v804
      %830 = vmatprep.subr.mxu0 0.0
      %831 = vmatpush1.msra.mxu0 %v805
      %832 = vmatprep.subr.mxu0 0.0
      %833 = vmatpush1.msra.mxu0 %v806
      %834 = vmatprep.subr.mxu0 0.0
      %835 = vmatpush1.msra.mxu0 %v807
      %836 = vmatprep.subr.mxu0 0.0
      %837 = vmatpush1.msra.mxu0 %v808
      %838 = vmatprep.subr.mxu0 0.0
      %839 = vmatpush1.msra.mxu0 %v809
      %840 = vmatprep.subr.mxu0 0.0
      %841 = vmatpush1.msra.mxu0 %v810
      %842 = vmatprep.subr.mxu0 0.0
      %843 = vmatpush1.msra.mxu0 %v811
      %844 = vmatprep.subr.mxu0 0.0
      %845 = vmatpush1.msra.mxu0 %v812
      %846 = vmatprep.subr.mxu0 0.0
      %847 = vmatpush1.msra.mxu0 %v813
      %848 = vmatprep.subr.mxu0 0.0
      %849 = vmatpush1.msra.mxu0 %v814
      %850 = vmatprep.subr.mxu0 0.0
      %851 = vmatpush1.msra.mxu0 %v815
      %852 = vmatprep.subr.mxu0 0.0
      %853 = vmatpush1.msra.mxu0 %v816
      %854 = vmatprep.subr.mxu0 0.0
      %855 = vmatpush1.msra.mxu0 %v817
      %856 = vmatprep.subr.mxu0 0.0
      %857 = vmatpush1.msra.mxu0 %v818
      %858 = vmatprep.subr.mxu0 0.0
      %859 = vmatpush1.msra.mxu0 0.0
      %860 = vmatprep.subr.mxu0 0.0
      %861 = vmatpush1.msra.mxu0 0.0
      %862 = vmatprep.subr.mxu0 0.0
      %863 = vmatpush1.msra.mxu0 0.0
      %864 = vmatprep.subr.mxu0 0.0
      %865 = vmatpush1.msra.mxu0 0.0
      %866 = vmatprep.subr.mxu0 0.0
      %867 = vmatpush1.msra.mxu0 0.0
      %868 = vmatprep.subr.mxu0 0.0
      %869 = vmatpush1.msra.mxu0 0.0
      %870 = vmatprep.subr.mxu0 0.0
      %871 = vmatpush1.msra.mxu0 0.0
      %872 = vmatprep.subr.mxu0 0.0
      %873 = vmatpush1.msra.mxu0 0.0
      %874 = vmatprep.subr.mxu0 0.0
      %875 = vmatpush1.msra.mxu0 0.0
      %876 = vmatprep.subr.mxu0 0.0
      %877 = vmatpush1.msra.mxu0 0.0
      %878 = vmatprep.subr.mxu0 0.0
      %879 = vmatpush1.msra.mxu0 0.0
      %880 = vmatprep.subr.mxu0 0.0
      %881 = vmatpush1.msra.mxu0 0.0
      %882 = vmatprep.subr.mxu0 0.0
      %883 = vmatpush1.msra.mxu0 0.0
      %884 = vmatprep.subr.mxu0 0.0
      %885 = vmatpush1.msra.mxu0 0.0
      %886 = vmatprep.subr.mxu0 0.0
      %887 = vmatpush1.msra.mxu0 0.0
      %888 = vmatprep.subr.mxu0 0.0
      %889 = vmatpush1.msra.mxu0 0.0
      %890 = vmatprep.mubr.f32.mxu0 0.0
      %891 = vmatmul.mubr.f32.gmra.mrb[0].mxu0 %v800
      %v892 = vpop.f32.mrb[0].mxu0
      %v893 = vadd.f32 %v824, %v892
      %v894 = vpop.f32.mrb[0].mxu0
      %895 = vmatprep.mubr.f32.mxu0 0.0
      %896 = vmatmul.mubr.f32.gmra.mrb[0].mxu0 %v801
      %v897 = vpop.f32.mrb[0].mxu0
      %v898 = vadd.f32 %v824, %v897
      %v899 = vpop.f32.mrb[0].mxu0
      %900 = vmatprep.mubr.f32.mxu0 0.0
      %901 = vmatmul.mubr.f32.gmra.mrb[0].mxu0 %v802
      %v902 = vpop.f32.mrb[0].mxu0
      %v903 = vadd.f32 %v824, %v902
      %v904 = vpop.f32.mrb[0].mxu0
      %905 = vdwg.mxu0
      %906 = vst.msk [vmem:[%s378] sm:$0xff] %vm694, %v655
      %907 = vst.msk [vmem:[%s378 + $0x8] sm:$0xff] %vm694, %v656
      %908 = vst.msk [vmem:[%s378 + $0x10] sm:$0xff] %vm694, %v657
      %vm909 = vcmask 7168
      %910 = vst.msk [vmem:[%s384] sm:$0xff] %vm909, %v697
      %911 = vst.msk [vmem:[%s384 + $0x8] sm:$0xff] %vm909, %v700
      %912 = vst.msk [vmem:[%s384 + $0x10] sm:$0xff] %vm909, %v703
      %913 = vst.msk [vmem:[%s390] sm:$0xff] %vm909, %v893
      %914 = vst.msk [vmem:[%s390 + $0x8] sm:$0xff] %vm909, %v898
      %915 = vst.msk [vmem:[%s390 + $0x10] sm:$0xff] %vm909, %v903
      %s916 = smul.u32 3, %s24
      %p917 = scmp.lt.s32.totalorder %s916, 5
      %s918 = scalar_select %p917, %s916, 5
      %s919 = smul.addr %s918, 8
      %s920 = scalar_lea.vmem %s8, %s919
      %s921 = smul.u32 3, %s24
      %p922 = scmp.lt.s32.totalorder %s921, 5
      %s923 = scalar_select %p922, %s921, 5
      %s924 = smul.addr %s923, 8
      %s925 = scalar_lea.vmem %s9, %s924
      %s926 = smul.u32 3, %s24
      %p927 = scmp.lt.s32.totalorder %s926, 5
      %s928 = scalar_select %p927, %s926, 5
      %s929 = smul.addr %s928, 8
      %s930 = scalar_lea.vmem %s10, %s929
      // Predicated region
      $region53: #{tpu_custom_call.1} parent=51 // pred_check
        %p931 = pneg %p215
      $region54: #{tpu_custom_call.1} parent=51 // pred_check_branch
        %933 = sbr.rel (%p931) target = $region56
      $region55: #{tpu_custom_call.1} parent=51 // pred_region
        %s934 = smul.u32 3, %s24
      $region56: #{tpu_custom_call.1} parent=51 // pred_fallthru
        _
      // Predicated region
      $region57: #{tpu_custom_call.1} parent=51 // pred_check
        %p935 = pneg %p241
      $region58: #{tpu_custom_call.1} parent=51 // pred_check_branch
        %937 = sbr.rel (%p935) target = $region60
      $region59: #{tpu_custom_call.1} parent=51 // pred_region
        %s938 = smul.u32 3, %s24
      $region60: #{tpu_custom_call.1} parent=51 // pred_fallthru
        _
      // Predicated region
      $region61: #{tpu_custom_call.1} parent=51 // pred_check
        %p939 = pneg %p267
      $region62: #{tpu_custom_call.1} parent=51 // pred_check_branch
        %941 = sbr.rel (%p939) target = $region64
      $region63: #{tpu_custom_call.1} parent=51 // pred_region
        %s942 = smul.u32 3, %s24
      $region64: #{tpu_custom_call.1} parent=51 // pred_fallthru
        _
    $region52: #{tpu_custom_call.1} parent=5 // pred_fallthru
      _
    %p943 = scmp.le.s32.totalorder 2, %s19
    // Predicated region
    $region65: #{tpu_custom_call.1} parent=5 // pred_check
      %p944 = pneg %p943
    $region66: #{tpu_custom_call.1} parent=5 // pred_check_branch
      %946 = sbr.rel (%p944) target = $region68
    $region67: #{tpu_custom_call.1} parent=5 // pred_region
      %s947 = ssub.s32 %s19, 2
      // Predicated region
      $region69: #{tpu_custom_call.1} parent=67 // pred_check
        %p948 = pneg %p221
      $region70: #{tpu_custom_call.1} parent=67 // pred_check_branch
        %950 = sbr.rel (%p948) target = $region72
      $region71: #{tpu_custom_call.1} parent=67 // pred_region
        %s951 = smul.u32 3, %s25
        %p952 = scmp.lt.s32.totalorder %s951, 5
        %s953 = scalar_select %p952, %s951, 5
        %s954 = smul.addr %s953, 8
        %s955 = scalar_lea.vmem %s8, %s954
      $region72: #{tpu_custom_call.1} parent=67 // pred_fallthru
        _
      // Predicated region
      $region73: #{tpu_custom_call.1} parent=67 // pred_check
        %p956 = pneg %p247
      $region74: #{tpu_custom_call.1} parent=67 // pred_check_branch
        %958 = sbr.rel (%p956) target = $region76
      $region75: #{tpu_custom_call.1} parent=67 // pred_region
        %s959 = smul.u32 3, %s25
        %p960 = scmp.lt.s32.totalorder %s959, 5
        %s961 = scalar_select %p960, %s959, 5
        %s962 = smul.addr %s961, 8
        %s963 = scalar_lea.vmem %s9, %s962
      $region76: #{tpu_custom_call.1} parent=67 // pred_fallthru
        _
      // Predicated region
      $region77: #{tpu_custom_call.1} parent=67 // pred_check
        %p964 = pneg %p273
      $region78: #{tpu_custom_call.1} parent=67 // pred_check_branch
        %966 = sbr.rel (%p964) target = $region80
      $region79: #{tpu_custom_call.1} parent=67 // pred_region
        %s967 = smul.u32 3, %s25
        %p968 = scmp.lt.s32.totalorder %s967, 5
        %s969 = scalar_select %p968, %s967, 5
        %s970 = smul.addr %s969, 8
        %s971 = scalar_lea.vmem %s10, %s970
      $region80: #{tpu_custom_call.1} parent=67 // pred_fallthru
        _
    $region68: #{tpu_custom_call.1} parent=5 // pred_fallthru
      _
  $region6: #{tpu_custom_call.1} parent=0 // loop_footer
    %s23 = sadd.s32 1, %s19
  $region7: #{tpu_custom_call.1} parent=0 // loop_footer_branch
    %18 = sbr.rel target = $region3
  $region8: #{tpu_custom_call.1} parent=0 // loop_exit
    _

</llo_original>
